<compile_context>
chip_gen: v6e
topology: v6e:2x2x1
jax: 0.10.0
libtpu: 0.0.40
codegen_flags: <defaults>
</compile_context>

<pallas_src>
import jax
import jax.numpy as jnp
from jax.experimental import pallas as pl
from jax.experimental.pallas import tpu as pltpu

_LANES = 128
_SUBLANES = 8
_VREG_ELEMS = _SUBLANES * _LANES  # 1024 f32 elements = one (8,128) vreg


def linear_kernel(x_ref, params_ref, o_ref):
    # x_ref: (rows, 128) f32 in VMEM (lane-dense padded view of the input column vector)
    # params_ref: (2,) f32 in SMEM -> [w, b]
    w = params_ref[0]
    b = params_ref[1]
    o_ref[...] = x_ref[...] * w + b


def make_params(w, b, dtype=jnp.float32):
    """Build the merged (2,) [w, b] SMEM operand once at init (hoisted out of forward)."""
    return jnp.stack([w.reshape(()), b.reshape(())]).astype(dtype)


@jax.jit
def myliner_forward(x, params):
    """x: (N, 1) f32, params: (2,) f32 = [w, b]  ->  (N, 1) f32"""
    n = x.shape[0]
    # Round up to whole (8, 128) vregs so loads/stores are unmasked full-vreg ops.
    n_pad = ((n + _VREG_ELEMS - 1) // _VREG_ELEMS) * _VREG_ELEMS
    rows = n_pad // _LANES  # multiple of 8

    # Lane-dense padded slab: (N, 1) -> (rows, 128). Padded tail is sliced off below.
    x2d = jnp.pad(x.reshape(-1), (0, n_pad - n)).reshape(rows, _LANES)

    out2d = pl.pallas_call(
        linear_kernel,
        out_shape=jax.ShapeDtypeStruct((rows, _LANES), x.dtype),
        in_specs=[
            pl.BlockSpec(memory_space=pltpu.MemorySpace.VMEM),
            pl.BlockSpec(memory_space=pltpu.MemorySpace.SMEM),
        ],
        out_specs=pl.BlockSpec(memory_space=pltpu.MemorySpace.VMEM),
        # Slab is an intermediate inside this jit: donate it and write in place.
        input_output_aliases={0: 0},
    )(x2d, params)

    # Strip padding and restore the (N, 1) column-vector layout of nn.Linear output.
    return out2d.reshape(-1)[:n].reshape(n, 1)


if __name__ == "__main__":
    key = jax.random.PRNGKey(0)
    kx, kw, kb = jax.random.split(key, 3)

    # Input matching the script: x = torch.rand([500, 1])
    x = jax.random.uniform(kx, (500, 1), dtype=jnp.float32)

    # Deterministic parameter init mimicking nn.Linear(1, 1) default:
    # uniform(-1/sqrt(fan_in), 1/sqrt(fan_in)) with fan_in = 1
    w = jax.random.uniform(kw, (1, 1), dtype=jnp.float32, minval=-1.0, maxval=1.0)
    b = jax.random.uniform(kb, (1,), dtype=jnp.float32, minval=-1.0, maxval=1.0)

    # Params built once at init (hoisted out of the per-forward path).
    params = make_params(w, b, x.dtype)

    out = myliner_forward(x, params)
    out = jax.block_until_ready(out)

    # Reference check against plain JAX linear
    ref = x @ w.T + b
    assert out.shape == (500, 1)
    assert jnp.allclose(out, ref, atol=1e-6), "mismatch vs reference"

    print("KERNEL_OK")
</pallas_src>

<mosaic_0001>
module attributes {stable_mosaic.version = 11 : i64} {
  func.func @linear_kernel(%arg0: memref<8x128xf32, #tpu.memory_space<vmem>>, %arg1: memref<2xf32, #tpu.memory_space<smem>>, %arg2: memref<8x128xf32, #tpu.memory_space<vmem>>) attributes {dimension_semantics = [], scalar_prefetch = 0 : i64, scratch_operands = 0 : i64, tpu.core_type = #tpu.core_type<tc>} {
    %c0 = arith.constant 0 : index
    %0 = memref.load %arg1[%c0] : memref<2xf32, #tpu.memory_space<smem>>
    %c1 = arith.constant 1 : index
    %1 = memref.load %arg1[%c1] : memref<2xf32, #tpu.memory_space<smem>>
    %c0_0 = arith.constant 0 : index
    %c0_1 = arith.constant 0 : index
    %2 = vector.load %arg0[%c0_0, %c0_1] : memref<8x128xf32, #tpu.memory_space<vmem>>, vector<8x128xf32>
    %3 = vector.broadcast %0 : f32 to vector<8x128xf32>
    %4 = arith.mulf %2, %3 : vector<8x128xf32>
    %5 = vector.broadcast %1 : f32 to vector<8x128xf32>
    %6 = arith.addf %4, %5 : vector<8x128xf32>
    %c0_2 = arith.constant 0 : index
    %c0_3 = arith.constant 0 : index
    %7 = vector.load %arg2[%c0_2, %c0_3] : memref<8x128xf32, #tpu.memory_space<vmem>>, vector<8x128xf32>
    tpu.vector_store %arg2[%c0_2, %c0_3], %6 {strides = array<i32>} : memref<8x128xf32, #tpu.memory_space<vmem>>, vector<8x128xf32>,
    return
  }
}

</mosaic_0001>

<llo_original>
// kernel: myliner_forward.1
$region0: #{myliner_forward.1}
  #allocation0 [shape = 'u32[]', space=smem, size = 0x4, offset = 0x4, fixed_abs, tag = 'smem constant byte address 0x4 - core index']
  #allocation1 [shape = 'u32[144,128]{1,0:T(1,128)}', space=vmem, size = 0x12000, scoped, tag = 'internal scratch']
  %s0 = inlined_call_operand.vmem [shape: f32[8,128], index: 0, kind: input, shape index: {}, may-alias: {0,2}]
  %s1 = inlined_call_operand.vmem [shape: f32[2], index: 1, kind: input, shape index: {}]
  %s2 = inlined_call_operand.vmem [shape: f32[8,128], index: 2, kind: output, shape index: {}, may-alias: {0,2}]
  %s3 = sld [smem:[#allocation0]]
  $region22: #{myliner_forward.1} parent=0
    _
  %s5 = ssub.s32 1, %s3
  %s6 = scalar_select 0, %s5, %s3
  $region1: #{myliner_forward.1} parent=0
    #allocation2 [shape = 'u8[512]{0}', space=smem, size = 0x200, scoped, tag = 'input window, operand 1, single buffered']
    #allocation3 [shape = 's32[1]{0}', space=sflag, size = 0x4, scoped, tag = 'scoped memory for myliner_forward.1']
    %7 = vsyncpa [#allocation3], 0
    // Predicated region
    $region2: #{myliner_forward.1} parent=1 // pred_check
      _
    $region3: #{myliner_forward.1} parent=1 // pred_check_branch
      %9 = sbr.rel (0) target = $region5
    $region4: #{myliner_forward.1} parent=1 // pred_region
      _
    $region5: #{myliner_forward.1} parent=1 // pred_fallthru
      _
    // Predicated region
    $region6: #{myliner_forward.1} parent=1 // pred_check
      _
    $region7: #{myliner_forward.1} parent=1 // pred_check_branch
      %11 = sbr.rel (0) target = $region9
    $region8: #{myliner_forward.1} parent=1 // pred_region
      %s13 = ssub.s32 16, 16
      %14 = vsyncadd [#allocation3], %s13
      %s16 = sshll.u32 %s1, 4
      %s17 = int_to_ptr.vmem [resolvable:$true] %s16
      %19 = dma.vmem_to_smem %s17, 16, [#allocation2], [#allocation3]
    $region9: #{myliner_forward.1} parent=1 // pred_fallthru
      _
    // Predicated region
    $region10: #{myliner_forward.1} parent=1 // pred_check
      _
    $region11: #{myliner_forward.1} parent=1 // pred_check_branch
      %21 = sbr.rel (0) target = $region13
    $region12: #{myliner_forward.1} parent=1 // pred_region
      %22 = dma.done [#allocation3], 16
    $region13: #{myliner_forward.1} parent=1 // pred_fallthru
      _
    %23 = sfence
    %s24 = sld [smem:[#allocation2]]
    %s25 = sld [smem:[#allocation2 + $0x1]]
    %v26 = vld [vmem:[%s0] sm:$0xff]
    %v27 = vstv %s24
    %v28 = vmul.f32 %v26, %v27
    %v29 = vstv %s25
    %v30 = vadd.f32 %v28, %v29
    %31 = vst [vmem:[%s2] sm:$0xff] %v30
    // Predicated region
    $region14: #{myliner_forward.1} parent=1 // pred_check
      _
    $region15: #{myliner_forward.1} parent=1 // pred_check_branch
      %33 = sbr.rel (0) target = $region17
    $region16: #{myliner_forward.1} parent=1 // pred_region
      _
    $region17: #{myliner_forward.1} parent=1 // pred_fallthru
      _
    // Predicated region
    $region18: #{myliner_forward.1} parent=1 // pred_check
      _
    $region19: #{myliner_forward.1} parent=1 // pred_check_branch
      %35 = sbr.rel (0) target = $region21
    $region20: #{myliner_forward.1} parent=1 // pred_region
      _
    $region21: #{myliner_forward.1} parent=1 // pred_fallthru
      _
    %36 = vsyncpa [#allocation3], 1

</llo_original>
